<compile_context>
chip_gen: v6e
topology: v6e:2x2x1
jax: 0.10.0
libtpu: 0.0.40
codegen_flags: <defaults>
</compile_context>

<pallas_src>
import math

import jax
import jax.numpy as jnp
from jax.experimental import pallas as pl
from jax.experimental.pallas import tpu as pltpu


def _round_up(n, m):
    return ((n + m - 1) // m) * m


def _pick_tile(seq_len, requested, align):
    """Split seq_len into roughly equal tiles no larger than `requested`,
    rounded up to `align`, so padding is minimal and blocks stay aligned."""
    n = max(1, math.ceil(seq_len / requested))
    return _round_up(math.ceil(seq_len / n), align)


def _supports_bf16_eup():
    """bf16 EUP (exp) path exists on v6e / v7x; v2-v5 lack bf16 EUP/VPU."""
    try:
        kind = jax.devices()[0].device_kind.lower()
    except Exception:
        return False
    return not any(t in kind for t in ("v2", "v3", "v4", "v5"))


def _make_attention_kernel(needs_kv_mask, bf16_exp):
    """Build the fused attention kernel body (static config closed over)."""

    def kernel(*refs):
        if needs_kv_mask:
            (q_ref, kT_ref, v_ref, wq_ref, bq_ref, mask_ref,
             o_ref, q_scr, acc_scr, m_scr, l_scr) = refs
        else:
            (q_ref, kT_ref, v_ref, wq_ref, bq_ref,
             o_ref, q_scr, acc_scr, m_scr, l_scr) = refs
            mask_ref = None

        ki = pl.program_id(2)

        # ---- init: first kv tile of this (batch, q-tile) --------------------
        @pl.when(ki == 0)
        def _init():
            # Q projection (scale already folded into wq/bq in the wrapper).
            qp = jnp.dot(q_ref[...], wq_ref[...],
                         preferred_element_type=jnp.float32) + bq_ref[...]
            q_scr[...] = qp.astype(q_scr.dtype)
            m_scr[...] = jnp.full(m_scr.shape, -jnp.inf, m_scr.dtype)
            l_scr[...] = jnp.zeros(l_scr.shape, l_scr.dtype)
            acc_scr[...] = jnp.zeros(acc_scr.shape, acc_scr.dtype)

        # ---- scores: Q @ K'^T (K' pre-transposed -> no in-kernel transpose) --
        s = jnp.dot(q_scr[...], kT_ref[...],
                    preferred_element_type=jnp.float32)        # (tq, tk)

        if needs_kv_mask:  # additive 0 / -1e30 bias row for padded key columns
            s = s + mask_ref[0:1, :]

        # ---- online softmax + PV accumulation -------------------------------
        m_prev = m_scr[...]
        m_new = jnp.maximum(m_prev, s.max(axis=-1, keepdims=True))
        alpha = jnp.exp(m_prev - m_new)
        x = s - m_new
        if bf16_exp:
            p = jnp.exp(x.astype(jnp.bfloat16))                # bf16 EUP path
            l_new = p.astype(jnp.float32).sum(axis=-1, keepdims=True)
            pv = jnp.dot(p, v_ref[...], preferred_element_type=jnp.float32)
        else:
            p = jnp.exp(x)                                     # f32 EUP path
            l_new = p.sum(axis=-1, keepdims=True)
            pv = jnp.dot(p.astype(jnp.bfloat16), v_ref[...],
                         preferred_element_type=jnp.float32)
        l_scr[...] = alpha * l_scr[...] + l_new
        acc_scr[...] = alpha * acc_scr[...] + pv
        m_scr[...] = m_new

        # ---- finalize: last kv tile ------------------------------------------
        @pl.when(ki == pl.num_programs(2) - 1)
        def _finalize():
            inv_l = pl.reciprocal(l_scr[...], approx=True)
            o_ref[...] = (acc_scr[...] * inv_l).astype(o_ref.dtype)

    return kernel


def attention_drug_forward(query, key, value, params, *, tq=512, tk=512,
                           bf16_exp=None):
    """query/key/value: (..., S, E) -> (..., Sq, E) float32 (matches the module)."""
    wq, bq, wk, bk, wv, bv = params

    lead = query.shape[:-2]
    sq, e = query.shape[-2:]
    sk = key.shape[-2]
    b = int(math.prod(lead)) if lead else 1
    if bf16_exp is None:
        bf16_exp = _supports_bf16_eup()

    scale = 1.0 / math.sqrt(131.0)          # module divides by sqrt(131) always
    e_p = _round_up(e, 128)                 # lane-dense embedding dim

    # ---- tile selection (16-row bf16 sublane alignment; 128-lane K'^T) ------
    tq = _pick_tile(sq, tq, 16)
    tk = _pick_tile(sk, tk, 16 if sk <= tk else 128)
    sq_p = _round_up(sq, tq)
    sk_p = _round_up(sk, tk)
    nq, nk = sq_p // tq, sk_p // tk

    q3 = query.reshape(b, sq, e).astype(jnp.float32)
    k3 = key.reshape(b, sk, e).astype(jnp.float32)
    v3 = value.reshape(b, sk, e).astype(jnp.float32)

    # ---- K / V projections hoisted out of the kernel (run ONCE, f32 math) ---
    kproj = k3 @ wk + jnp.reshape(bk, (1, 1, e))
    vproj = v3 @ wv + jnp.reshape(bv, (1, 1, e))

    def _pad_se(x):   # zero-pad (b, s, e) -> (b, s_p, e_p)
        s_p = sk_p if x.shape[1] in (sk,) else sq_p
        return jnp.pad(x, ((0, 0), (0, s_p - x.shape[1]), (0, e_p - x.shape[2])))

    q_in = jnp.pad(q3, ((0, 0), (0, sq_p - sq), (0, e_p - e))).astype(jnp.bfloat16)
    kT_in = jnp.swapaxes(_pad_se(kproj), 1, 2).astype(jnp.bfloat16)   # (b, e_p, sk_p)
    v_in = _pad_se(vproj).astype(jnp.bfloat16)                        # (b, sk_p, e_p)

    # Q projection weights: lane-pad to e_p and fold in the 1/sqrt(131) scale.
    wq_p = (jnp.zeros((e_p, e_p), jnp.float32)
            .at[:e, :e].set(wq * scale)).astype(jnp.bfloat16)
    bq_p = (jnp.zeros((1, e_p), jnp.float32)
            .at[:, :e].set(jnp.reshape(bq, (1, e)) * scale))

    needs_kv_mask = sk_p != sk
    inputs = [q_in, kT_in, v_in, wq_p, bq_p]
    in_specs = [
        pl.BlockSpec((pl.Squeezed(), tq, e_p), lambda bi, qi, ki: (bi, qi, 0)),  # query
        pl.BlockSpec((pl.Squeezed(), e_p, tk), lambda bi, qi, ki: (bi, 0, ki)),  # K'^T
        pl.BlockSpec((pl.Squeezed(), tk, e_p), lambda bi, qi, ki: (bi, ki, 0)),  # V'
        pl.BlockSpec((e_p, e_p), lambda bi, qi, ki: (0, 0)),                     # Wq
        pl.BlockSpec((1, e_p), lambda bi, qi, ki: (0, 0)),                       # bq
    ]
    if needs_kv_mask:
        col = jax.lax.broadcasted_iota(jnp.int32, (8, sk_p), 1)
        kv_bias = jnp.where(col < sk, 0.0, -1e30).astype(jnp.float32)
        inputs.append(kv_bias)
        in_specs.append(pl.BlockSpec((8, tk), lambda bi, qi, ki: (0, ki)))

    kernel = _make_attention_kernel(needs_kv_mask, bf16_exp)

    flops = int(2 * b * sq_p * e_p * e_p             # fused Q projection
                + 4 * b * sq_p * sk_p * e_p)         # QK^T + PV
    transcendentals = int(b * sq_p * sk_p)
    bytes_accessed = int(2 * b * sq_p * e_p                 # query (bf16)
                         + 2 * 2 * b * sk_p * e_p * nq      # K'^T + V' re-read / q-tile
                         + 2 * e_p * e_p + 4 * e_p          # Wq, bq
                         + 4 * b * sq_p * e_p)              # output (f32)

    out = pl.pallas_call(
        kernel,
        out_shape=jax.ShapeDtypeStruct((b, sq_p, e_p), jnp.float32),
        grid=(b, nq, nk),
        in_specs=in_specs,
        out_specs=pl.BlockSpec((pl.Squeezed(), tq, e_p),
                               lambda bi, qi, ki: (bi, qi, 0)),
        scratch_shapes=[
            pltpu.VMEM((tq, e_p), jnp.bfloat16),   # projected+scaled Q tile (resident)
            pltpu.VMEM((tq, e_p), jnp.float32),    # output accumulator (lane-dense)
            pltpu.VMEM((tq, 1), jnp.float32),      # running max
            pltpu.VMEM((tq, 1), jnp.float32),      # running softmax denom
        ],
        compiler_params=pltpu.CompilerParams(
            dimension_semantics=("parallel", "parallel", "arbitrary"),
        ),
        cost_estimate=pl.CostEstimate(
            flops=flops,
            transcendentals=transcendentals,
            bytes_accessed=bytes_accessed,
        ),
    )(*inputs)

    out = out[:, :sq, :e]
    return out.reshape(*lead, sq, e)


def init_params(key, embed_dim):
    """Mimic nn.Linear default init (uniform +-1/sqrt(fan_in)); W stored (in, out)."""
    ks = jax.random.split(key, 6)
    bound = 1.0 / math.sqrt(embed_dim)

    def lin(kw, kb):
        w = jax.random.uniform(kw, (embed_dim, embed_dim), jnp.float32, -bound, bound)
        bias = jax.random.uniform(kb, (1, embed_dim), jnp.float32, -bound, bound)
        return w, bias

    wq, bq = lin(ks[0], ks[1])
    wk, bk = lin(ks[2], ks[3])
    wv, bv = lin(ks[4], ks[5])
    return wq, bq, wk, bk, wv, bv


if __name__ == "__main__":
    root = jax.random.PRNGKey(0)
    kq, kk, kv, kp = jax.random.split(root, 4)

    batch, sq, sk, embed = 2, 96, 200, 32
    query = jax.random.normal(kq, (batch, sq, embed), jnp.float32)
    key_in = jax.random.normal(kk, (batch, sk, embed), jnp.float32)
    value = jax.random.normal(kv, (batch, sk, embed), jnp.float32)
    params = init_params(kp, embed)

    # Small tiles (still 16/128-aligned) so the demo exercises multi-tile q and
    # kv grids, the online-softmax reduction and kv-padding masking (sk_p=256).
    out = attention_drug_forward(query, key_in, value, params, tq=48, tk=128)
    jax.block_until_ready(out)

    # Pure-JAX f32 reference (kernel uses bf16 operands with f32 accumulation).
    wq, bq, wk, bk, wv, bv = params
    Q = query @ wq + bq
    K = key_in @ wk + bk
    V = value @ wv + bv
    scores = jnp.einsum("bqd,bkd->bqk", Q, K) / jnp.sqrt(jnp.float32(131.0))
    attn = jax.nn.softmax(scores, axis=-1)
    ref = jnp.einsum("bqk,bkd->bqd", attn, V)

    assert out.shape == ref.shape == (batch, sq, embed)
    max_err = float(jnp.max(jnp.abs(out - ref)))
    assert jnp.allclose(out, ref, atol=2e-2, rtol=2e-2), f"max abs err {max_err}"
    print("KERNEL_OK")
</pallas_src>

<mosaic_0001>
module attributes {stable_mosaic.version = 11 : i64} {
  func.func @kernel(%arg0: i32, %arg1: i32, %arg2: i32, %arg3: memref<1x48x128xbf16, #tpu.memory_space<vmem>>, %arg4: memref<1x128x128xbf16, #tpu.memory_space<vmem>>, %arg5: memref<1x128x128xbf16, #tpu.memory_space<vmem>>, %arg6: memref<128x128xbf16, #tpu.memory_space<vmem>>, %arg7: memref<1x128xf32, #tpu.memory_space<vmem>>, %arg8: memref<8x128xf32, #tpu.memory_space<vmem>>, %arg9: memref<1x48x128xf32, #tpu.memory_space<vmem>>, %arg10: memref<48x128xbf16, #tpu.memory_space<vmem>>, %arg11: memref<48x128xf32, #tpu.memory_space<vmem>>, %arg12: memref<48x1xf32, #tpu.memory_space<vmem>>, %arg13: memref<48x1xf32, #tpu.memory_space<vmem>>) attributes {dimension_semantics = [#tpu.dimension_semantics<parallel>, #tpu.dimension_semantics<parallel>, #tpu.dimension_semantics<arbitrary>], iteration_bounds = array<i64: 2, 2, 2>, scalar_prefetch = 0 : i64, scratch_operands = 4 : i64, tpu.core_type = #tpu.core_type<tc>, window_params = [{transform_indices = @transform_0, window_bounds = array<i64: 1, 48, 128>}, {transform_indices = @transform_1, window_bounds = array<i64: 1, 128, 128>}, {transform_indices = @transform_2, window_bounds = array<i64: 1, 128, 128>}, {pipeline_mode = #tpu.pipeline_mode<synchronous>, transform_indices = @transform_3, window_bounds = array<i64: 128, 128>}, {pipeline_mode = #tpu.pipeline_mode<synchronous>, transform_indices = @transform_4, window_bounds = array<i64: 1, 128>}, {transform_indices = @transform_5, window_bounds = array<i64: 8, 128>}, {transform_indices = @transform_6, window_bounds = array<i64: 1, 48, 128>}]} {
    %c0_i32 = arith.constant 0 : i32
    %0 = arith.cmpi eq, %arg2, %c0_i32 : i32
    %1 = arith.extui %0 : i1 to i32
    %c0_i32_0 = arith.constant 0 : i32
    %2 = arith.cmpi ne, %1, %c0_i32_0 : i32
    scf.if %2 {
      %c0_26 = arith.constant 0 : index
      %c0_27 = arith.constant 0 : index
      %c0_28 = arith.constant 0 : index
      %39 = vector.load %arg3[%c0_26, %c0_27, %c0_28] : memref<1x48x128xbf16, #tpu.memory_space<vmem>>, vector<1x48x128xbf16>
      %40 = vector.shape_cast %39 : vector<1x48x128xbf16> to vector<48x128xbf16>
      %c0_29 = arith.constant 0 : index
      %c0_30 = arith.constant 0 : index
      %41 = vector.load %arg6[%c0_29, %c0_30] : memref<128x128xbf16, #tpu.memory_space<vmem>>, vector<128x128xbf16>
      %cst_31 = arith.constant dense<0.000000e+00> : vector<48x128xf32>
      %42 = tpu.matmul %40, %41, %cst_31 {dimension_numbers = #tpu.dot_dimension_numbers<[1], [0], [0], [1], [0, 0, 1, 1], [], []>} : vector<48x128xbf16>, vector<128x128xbf16>, vector<48x128xf32> -> vector<48x128xf32>
      %c0_32 = arith.constant 0 : index
      %c0_33 = arith.constant 0 : index
      %43 = vector.load %arg7[%c0_32, %c0_33] : memref<1x128xf32, #tpu.memory_space<vmem>>, vector<1x128xf32>
      %44 = vector.broadcast %43 : vector<1x128xf32> to vector<48x128xf32>
      %45 = arith.addf %42, %44 : vector<48x128xf32>
      %46 = arith.truncf %45 : vector<48x128xf32> to vector<48x128xbf16>
      %c0_34 = arith.constant 0 : index
      %c0_35 = arith.constant 0 : index
      %47 = vector.load %arg10[%c0_34, %c0_35] : memref<48x128xbf16, #tpu.memory_space<vmem>>, vector<48x128xbf16>
      tpu.vector_store %arg10[%c0_34, %c0_35], %46 {strides = array<i32>} : memref<48x128xbf16, #tpu.memory_space<vmem>>, vector<48x128xbf16>,
      %cst_36 = arith.constant 0xFF800000 : f32
      %48 = vector.broadcast %cst_36 : f32 to vector<48x1xf32>
      %c0_37 = arith.constant 0 : index
      %c0_38 = arith.constant 0 : index
      %49 = vector.load %arg12[%c0_37, %c0_38] : memref<48x1xf32, #tpu.memory_space<vmem>>, vector<48x1xf32>
      tpu.vector_store %arg12[%c0_37, %c0_38], %48 {strides = array<i32>} : memref<48x1xf32, #tpu.memory_space<vmem>>, vector<48x1xf32>,
      %cst_39 = arith.constant 0.000000e+00 : f32
      %50 = vector.broadcast %cst_39 : f32 to vector<48x1xf32>
      %c0_40 = arith.constant 0 : index
      %c0_41 = arith.constant 0 : index
      %51 = vector.load %arg13[%c0_40, %c0_41] : memref<48x1xf32, #tpu.memory_space<vmem>>, vector<48x1xf32>
      tpu.vector_store %arg13[%c0_40, %c0_41], %50 {strides = array<i32>} : memref<48x1xf32, #tpu.memory_space<vmem>>, vector<48x1xf32>,
      %cst_42 = arith.constant 0.000000e+00 : f32
      %52 = vector.broadcast %cst_42 : f32 to vector<48x128xf32>
      %c0_43 = arith.constant 0 : index
      %c0_44 = arith.constant 0 : index
      %53 = vector.load %arg11[%c0_43, %c0_44] : memref<48x128xf32, #tpu.memory_space<vmem>>, vector<48x128xf32>
      tpu.vector_store %arg11[%c0_43, %c0_44], %52 {strides = array<i32>} : memref<48x128xf32, #tpu.memory_space<vmem>>, vector<48x128xf32>,
    } else {
    }
    %c0 = arith.constant 0 : index
    %c0_1 = arith.constant 0 : index
    %3 = vector.load %arg10[%c0, %c0_1] : memref<48x128xbf16, #tpu.memory_space<vmem>>, vector<48x128xbf16>
    %c0_2 = arith.constant 0 : index
    %c0_3 = arith.constant 0 : index
    %c0_4 = arith.constant 0 : index
    %4 = vector.load %arg4[%c0_2, %c0_3, %c0_4] : memref<1x128x128xbf16, #tpu.memory_space<vmem>>, vector<1x128x128xbf16>
    %5 = vector.shape_cast %4 : vector<1x128x128xbf16> to vector<128x128xbf16>
    %cst = arith.constant dense<0.000000e+00> : vector<48x128xf32>
    %6 = tpu.matmul %3, %5, %cst {dimension_numbers = #tpu.dot_dimension_numbers<[1], [0], [0], [1], [0, 0, 1, 1], [], []>} : vector<48x128xbf16>, vector<128x128xbf16>, vector<48x128xf32> -> vector<48x128xf32>
    %c0_5 = arith.constant 0 : index
    %c0_6 = arith.constant 0 : index
    %7 = vector.load %arg8[%c0_5, %c0_6] : memref<8x128xf32, #tpu.memory_space<vmem>>, vector<1x128xf32>
    %8 = vector.broadcast %7 : vector<1x128xf32> to vector<48x128xf32>
    %9 = arith.addf %6, %8 : vector<48x128xf32>
    %c0_7 = arith.constant 0 : index
    %c0_8 = arith.constant 0 : index
    %10 = vector.load %arg12[%c0_7, %c0_8] : memref<48x1xf32, #tpu.memory_space<vmem>>, vector<48x1xf32>
    %cst_9 = arith.constant dense<0xFF800000> : vector<48xf32>
    %11 = vector.multi_reduction <maximumf>, %9, %cst_9 [1] : vector<48x128xf32> to vector<48xf32>
    %12 = vector.shape_cast %11 : vector<48xf32> to vector<48x1xf32>
    %13 = arith.maximumf %10, %12 : vector<48x1xf32>
    %14 = arith.subf %10, %13 : vector<48x1xf32>
    %15 = math.exp %14 : vector<48x1xf32>
    %16 = vector.broadcast %13 : vector<48x1xf32> to vector<48x128xf32>
    %17 = arith.subf %9, %16 : vector<48x128xf32>
    %18 = arith.truncf %17 : vector<48x128xf32> to vector<48x128xbf16>
    %19 = math.exp %18 : vector<48x128xbf16>
    %20 = arith.extf %19 : vector<48x128xbf16> to vector<48x128xf32>
    %cst_10 = arith.constant dense<0.000000e+00> : vector<48xf32>
    %21 = vector.multi_reduction <add>, %20, %cst_10 [1] : vector<48x128xf32> to vector<48xf32>
    %22 = vector.shape_cast %21 : vector<48xf32> to vector<48x1xf32>
    %c0_11 = arith.constant 0 : index
    %c0_12 = arith.constant 0 : index
    %c0_13 = arith.constant 0 : index
    %23 = vector.load %arg5[%c0_11, %c0_12, %c0_13] : memref<1x128x128xbf16, #tpu.memory_space<vmem>>, vector<1x128x128xbf16>
    %24 = vector.shape_cast %23 : vector<1x128x128xbf16> to vector<128x128xbf16>
    %cst_14 = arith.constant dense<0.000000e+00> : vector<48x128xf32>
    %25 = tpu.matmul %19, %24, %cst_14 {dimension_numbers = #tpu.dot_dimension_numbers<[1], [0], [0], [1], [0, 0, 1, 1], [], []>} : vector<48x128xbf16>, vector<128x128xbf16>, vector<48x128xf32> -> vector<48x128xf32>
    %c0_15 = arith.constant 0 : index
    %c0_16 = arith.constant 0 : index
    %26 = vector.load %arg13[%c0_15, %c0_16] : memref<48x1xf32, #tpu.memory_space<vmem>>, vector<48x1xf32>
    %27 = arith.mulf %15, %26 : vector<48x1xf32>
    %28 = arith.addf %27, %22 : vector<48x1xf32>
    %c0_17 = arith.constant 0 : index
    %c0_18 = arith.constant 0 : index
    %29 = vector.load %arg13[%c0_17, %c0_18] : memref<48x1xf32, #tpu.memory_space<vmem>>, vector<48x1xf32>
    tpu.vector_store %arg13[%c0_17, %c0_18], %28 {strides = array<i32>} : memref<48x1xf32, #tpu.memory_space<vmem>>, vector<48x1xf32>,
    %c0_19 = arith.constant 0 : index
    %c0_20 = arith.constant 0 : index
    %30 = vector.load %arg11[%c0_19, %c0_20] : memref<48x128xf32, #tpu.memory_space<vmem>>, vector<48x128xf32>
    %31 = vector.broadcast %15 : vector<48x1xf32> to vector<48x128xf32>
    %32 = arith.mulf %31, %30 : vector<48x128xf32>
    %33 = arith.addf %32, %25 : vector<48x128xf32>
    %c0_21 = arith.constant 0 : index
    %c0_22 = arith.constant 0 : index
    %34 = vector.load %arg11[%c0_21, %c0_22] : memref<48x128xf32, #tpu.memory_space<vmem>>, vector<48x128xf32>
    tpu.vector_store %arg11[%c0_21, %c0_22], %33 {strides = array<i32>} : memref<48x128xf32, #tpu.memory_space<vmem>>, vector<48x128xf32>,
    %c0_23 = arith.constant 0 : index
    %c0_24 = arith.constant 0 : index
    %35 = vector.load %arg12[%c0_23, %c0_24] : memref<48x1xf32, #tpu.memory_space<vmem>>, vector<48x1xf32>
    tpu.vector_store %arg12[%c0_23, %c0_24], %13 {strides = array<i32>} : memref<48x1xf32, #tpu.memory_space<vmem>>, vector<48x1xf32>,
    %c1_i32 = arith.constant 1 : i32
    %36 = arith.cmpi eq, %arg2, %c1_i32 : i32
    %37 = arith.extui %36 : i1 to i32
    %c0_i32_25 = arith.constant 0 : i32
    %38 = arith.cmpi ne, %37, %c0_i32_25 : i32
    scf.if %38 {
      %c0_26 = arith.constant 0 : index
      %c0_27 = arith.constant 0 : index
      %39 = vector.load %arg13[%c0_26, %c0_27] : memref<48x1xf32, #tpu.memory_space<vmem>>, vector<48x1xf32>
      %40 = tpu.reciprocal %39 {approx = true} : vector<48x1xf32> -> vector<48x1xf32>
      %c0_28 = arith.constant 0 : index
      %c0_29 = arith.constant 0 : index
      %41 = vector.load %arg11[%c0_28, %c0_29] : memref<48x128xf32, #tpu.memory_space<vmem>>, vector<48x128xf32>
      %42 = vector.broadcast %40 : vector<48x1xf32> to vector<48x128xf32>
      %43 = arith.mulf %41, %42 : vector<48x128xf32>
      %c0_30 = arith.constant 0 : index
      %c0_31 = arith.constant 0 : index
      %c0_32 = arith.constant 0 : index
      %44 = vector.load %arg9[%c0_30, %c0_31, %c0_32] : memref<1x48x128xf32, #tpu.memory_space<vmem>>, vector<1x48x128xf32>
      %45 = vector.shape_cast %44 : vector<1x48x128xf32> to vector<48x128xf32>
      %46 = vector.shape_cast %43 : vector<48x128xf32> to vector<1x48x128xf32>
      tpu.vector_store %arg9[%c0_30, %c0_31, %c0_32], %46 {strides = array<i32>} : memref<1x48x128xf32, #tpu.memory_space<vmem>>, vector<1x48x128xf32>,
    } else {
    }
    return
  }
  func.func @transform_0(%arg0: i32, %arg1: i32, %arg2: i32) -> (i32, i32, i32) {
    %c0_i32 = arith.constant 0 : i32
    %c0_i32_0 = arith.constant 0 : i32
    return %arg0, %arg1, %c0_i32 : i32, i32, i32
  }
  func.func @transform_1(%arg0: i32, %arg1: i32, %arg2: i32) -> (i32, i32, i32) {
    %c0_i32 = arith.constant 0 : i32
    %c0_i32_0 = arith.constant 0 : i32
    return %arg0, %c0_i32, %arg2 : i32, i32, i32
  }
  func.func @transform_2(%arg0: i32, %arg1: i32, %arg2: i32) -> (i32, i32, i32) {
    %c0_i32 = arith.constant 0 : i32
    %c0_i32_0 = arith.constant 0 : i32
    return %arg0, %arg2, %c0_i32 : i32, i32, i32
  }
  func.func @transform_3(%arg0: i32, %arg1: i32, %arg2: i32) -> (i32, i32) {
    %c0_i32 = arith.constant 0 : i32
    %c0_i32_0 = arith.constant 0 : i32
    %c0_i32_1 = arith.constant 0 : i32
    return %c0_i32, %c0_i32_0 : i32, i32
  }
  func.func @transform_4(%arg0: i32, %arg1: i32, %arg2: i32) -> (i32, i32) {
    %c0_i32 = arith.constant 0 : i32
    %c0_i32_0 = arith.constant 0 : i32
    %c0_i32_1 = arith.constant 0 : i32
    return %c0_i32, %c0_i32_0 : i32, i32
  }
  func.func @transform_5(%arg0: i32, %arg1: i32, %arg2: i32) -> (i32, i32) {
    %c0_i32 = arith.constant 0 : i32
    %c0_i32_0 = arith.constant 0 : i32
    return %c0_i32, %arg2 : i32, i32
  }
  func.func @transform_6(%arg0: i32, %arg1: i32, %arg2: i32) -> (i32, i32, i32) {
    %c0_i32 = arith.constant 0 : i32
    %c0_i32_0 = arith.constant 0 : i32
    return %arg0, %arg1, %c0_i32 : i32, i32, i32
  }
}

</mosaic_0001>

<llo_original>
// kernel: tpu_custom_call.1
$region0: #{tpu_custom_call.1}
  #allocation0 [shape = 'u32[]', space=smem, size = 0x4, offset = 0x4, fixed_abs, tag = 'smem constant byte address 0x4 - core index']
  #allocation1 [shape = 'u32[144,128]{1,0:T(1,128)}', space=vmem, size = 0x12000, scoped, tag = 'internal scratch']
  #allocation2 [shape = 'bf16[48,128]{1,0:T(8,128)(2,1)}', space=vmem, size = 0x3000, scoped, tag = 'scratch operand']
  #allocation3 [shape = 'f32[48,128]{1,0:T(8,128)}', space=vmem, size = 0x6000, scoped, tag = 'scratch operand']
  #allocation4 [shape = 'f32[48,1]{1,0:T(8,128)}', space=vmem, size = 0x6000, scoped, tag = 'scratch operand']
  #allocation5 [shape = 'f32[48,1]{1,0:T(8,128)}', space=vmem, size = 0x6000, scoped, tag = 'scratch operand']
  %s0 = inlined_call_operand.hbm [shape: bf16[2,96,128], index: 0, kind: input, shape index: {}]
  %s1 = inlined_call_operand.hbm [shape: bf16[2,128,256], index: 1, kind: input, shape index: {}]
  %s2 = inlined_call_operand.hbm [shape: bf16[2,256,128], index: 2, kind: input, shape index: {}]
  %s3 = inlined_call_operand.hbm [shape: bf16[128,128], index: 3, kind: input, shape index: {}]
  %s4 = inlined_call_operand.vmem [shape: f32[1,128], index: 4, kind: input, shape index: {}]
  %s5 = inlined_call_operand.hbm [shape: f32[8,256], index: 5, kind: input, shape index: {}]
  %s6 = inlined_call_operand.hbm [shape: f32[2,96,128], index: 6, kind: output, shape index: {}]
  %s7 = sld [smem:[#allocation0]]
  $region85: #{tpu_custom_call.1} parent=0
    _
  %s9 = ssub.s32 1, %s7
  %s10 = scalar_select 0, %s9, %s7
  $region1: #{tpu_custom_call.1} parent=0
    #allocation6 [shape = 'u8[24576]{0}', space=vmem, size = 0x6000, scoped, tag = 'input window, operand 0']
    #allocation7 [shape = 's32[2]{0}', space=sflag, size = 0x8, scoped, tag = 'scoped memory for tpu_custom_call.1']
    #allocation8 [shape = 's32[2]{0}', space=sflag, size = 0x8, scoped, tag = 'scoped memory for tpu_custom_call.1']
    #allocation9 [shape = 'u8[65536]{0}', space=vmem, size = 0x10000, scoped, tag = 'input window, operand 1']
    #allocation10 [shape = 's32[2]{0}', space=sflag, size = 0x8, scoped, tag = 'scoped memory for tpu_custom_call.1']
    #allocation11 [shape = 'u8[65536]{0}', space=vmem, size = 0x10000, scoped, tag = 'input window, operand 2']
    #allocation12 [shape = 'u8[32768]{0}', space=vmem, size = 0x8000, scoped, tag = 'input window, operand 3, single buffered']
    #allocation13 [shape = 's32[1]{0}', space=sflag, size = 0x4, scoped, tag = 'scoped memory for tpu_custom_call.1']
    #allocation14 [shape = 'u8[8192]{0}', space=vmem, size = 0x2000, scoped, tag = 'input window, operand 5']
    #allocation15 [shape = 'u8[49152]{0}', space=vmem, size = 0xc000, scoped, tag = 'output window, operand 0']
    %11 = vsyncpa [#allocation7], 0
    %s12 = scalar_lea.sflag [#allocation7], 1
    %13 = vsyncpa %s12, 0
    %14 = vsyncpa [#allocation10], 0
    %s15 = scalar_lea.sflag [#allocation10], 1
    %16 = vsyncpa %s15, 0
    %17 = vsyncpa [#allocation13], 0
    %18 = vsyncpa [#allocation8], 0
    %s19 = scalar_lea.sflag [#allocation8], 1
    %20 = vsyncpa %s19, 0
    loop: start=0, step=1, limit=10
    $region2: #{tpu_custom_call.1} parent=1 // loop_pre_header
      _
    $region3: #{tpu_custom_call.1} parent=1 // loop_header
      %s22 = sphi 0, %s26
      %p23 = scmp.ge.s32.totalorder %s22, 10
      %s29 = sphi 0, %s48
      %s30 = sphi 0, %s44
      %s31 = sphi 0, %s40
      %s32 = sphi 0, %s29
      %s33 = sphi 0, %s30
      %s34 = sphi 0, %s31
      %s35 = sphi 0, %s32
      %s36 = sphi 0, %s33
      %s37 = sphi 0, %s34
      %s53 = sphi 0, %s55
      %s56 = sphi 0, %s53
      %s57 = sphi 0, %s56
      %s73 = sphi 0, %s57
      %s81 = sphi 0, %s83
      %s84 = sphi 0, %s81
      %s85 = sphi 0, %s84
      %s101 = sphi 0, %s85
      %s109 = sphi 0, %s111
      %s112 = sphi 0, %s109
      %s113 = sphi 0, %s112
      %s129 = sphi 0, %s113
      %s133 = sphi 0, %s133
      %s135 = sphi 0, %s133
      %s136 = sphi 0, %s135
      %s150 = sphi 0, %s136
      %s154 = sphi 0, %s154
      %s156 = sphi 0, %s154
      %s157 = sphi 0, %s156
      %s171 = sphi 0, %s157
      %s177 = sphi 0, %s179
      %s180 = sphi 0, %s177
      %s181 = sphi 0, %s180
      %s197 = sphi 0, %s181
      %s205 = sphi 0, %s207
      %s208 = sphi 0, %s205
      %s209 = sphi 0, %s208
      %s225 = sphi 0, %s209
    $region4: #{tpu_custom_call.1} parent=1 // loop_header_branch
      %25 = sbr.rel (%p23) target = $region8
    $region5: #{tpu_custom_call.1} parent=1 // loop_body
      %s27 = ssub.s32 %s22, 1
      %s28 = ssub.s32 %s22, 2
      %s38 = sadd.s32 1, %s31
      %p39 = scmp.ge.s32.totalorder %s38, 2
      %s40 = scalar_select %p39, 0, %s38
      %s41 = sadd.s32 1, %s30
      %s42 = scalar_select %p39, %s41, %s30
      %p43 = scmp.ge.s32.totalorder %s42, 2
      %s44 = scalar_select %p43, 0, %s42
      %s45 = sadd.s32 1, %s29
      %s46 = scalar_select %p43, %s45, %s29
      %p47 = scmp.ge.s32.totalorder %s46, 2
      %s48 = scalar_select %p47, 0, %s46
      %s49 = ssub.s32 %s29, %s48
      %s50 = ssub.s32 %s30, %s44
      %s51 = sor.u32 %s49, %s50
      %p52 = scmp.eq.s32.totalorder %s51, 0
      %s54 = sadd.s32 %s53, 1
      %s55 = scalar_select %p52, %s53, %s54
      %p58 = pneg %p52
      %p59 = scmp.eq.s32.totalorder %s22, 7
      %p60 = por %p58, %p59
      %p61 = scmp.ne.s32.totalorder %s53, %s56
      %p62 = scmp.eq.s32.totalorder %s22, 0
      %p63 = por %p61, %p62
      %p64 = scmp.ne.s32.totalorder %s53, %s56
      %p65 = scmp.eq.s32.totalorder %s27, 7
      %p66 = por %p64, %p65
      %p67 = scmp.ne.s32.totalorder %s56, %s57
      %p68 = scmp.eq.s32.totalorder %s27, 0
      %p69 = por %p67, %p68
      %p70 = scmp.ne.s32.totalorder %s56, %s57
      %p71 = scmp.eq.s32.totalorder %s28, 7
      %p72 = por %p70, %p71
      %p74 = scmp.ne.s32.totalorder %s57, %s73
      %p75 = scmp.eq.s32.totalorder %s28, 0
      %p76 = por %p74, %p75
      %s77 = ssub.s32 %s29, %s48
      %s78 = ssub.s32 %s31, %s40
      %s79 = sor.u32 %s77, %s78
      %p80 = scmp.eq.s32.totalorder %s79, 0
      %s82 = sadd.s32 %s81, 1
      %s83 = scalar_select %p80, %s81, %s82
      %p86 = pneg %p80
      %p87 = scmp.eq.s32.totalorder %s22, 7
      %p88 = por %p86, %p87
      %p89 = scmp.ne.s32.totalorder %s81, %s84
      %p90 = scmp.eq.s32.totalorder %s22, 0
      %p91 = por %p89, %p90
      %p92 = scmp.ne.s32.totalorder %s81, %s84
      %p93 = scmp.eq.s32.totalorder %s27, 7
      %p94 = por %p92, %p93
      %p95 = scmp.ne.s32.totalorder %s84, %s85
      %p96 = scmp.eq.s32.totalorder %s27, 0
      %p97 = por %p95, %p96
      %p98 = scmp.ne.s32.totalorder %s84, %s85
      %p99 = scmp.eq.s32.totalorder %s28, 7
      %p100 = por %p98, %p99
      %p102 = scmp.ne.s32.totalorder %s85, %s101
      %p103 = scmp.eq.s32.totalorder %s28, 0
      %p104 = por %p102, %p103
      %s105 = ssub.s32 %s29, %s48
      %s106 = ssub.s32 %s31, %s40
      %s107 = sor.u32 %s105, %s106
      %p108 = scmp.eq.s32.totalorder %s107, 0
      %s110 = sadd.s32 %s109, 1
      %s111 = scalar_select %p108, %s109, %s110
      %p114 = pneg %p108
      %p115 = scmp.eq.s32.totalorder %s22, 7
      %p116 = por %p114, %p115
      %p117 = scmp.ne.s32.totalorder %s109, %s112
      %p118 = scmp.eq.s32.totalorder %s22, 0
      %p119 = por %p117, %p118
      %p120 = scmp.ne.s32.totalorder %s109, %s112
      %p121 = scmp.eq.s32.totalorder %s27, 7
      %p122 = por %p120, %p121
      %p123 = scmp.ne.s32.totalorder %s112, %s113
      %p124 = scmp.eq.s32.totalorder %s27, 0
      %p125 = por %p123, %p124
      %p126 = scmp.ne.s32.totalorder %s112, %s113
      %p127 = scmp.eq.s32.totalorder %s28, 7
      %p128 = por %p126, %p127
      %p130 = scmp.ne.s32.totalorder %s113, %s129
      %p131 = scmp.eq.s32.totalorder %s28, 0
      %p132 = por %p130, %p131
      %s134 = sadd.s32 %s133, 1
      %p137 = scmp.eq.s32.totalorder %s22, 7
      %p138 = scmp.ne.s32.totalorder %s133, %s135
      %p139 = scmp.eq.s32.totalorder %s22, 0
      %p140 = por %p138, %p139
      %p141 = scmp.ne.s32.totalorder %s133, %s135
      %p142 = scmp.eq.s32.totalorder %s27, 7
      %p143 = por %p141, %p142
      %p144 = scmp.ne.s32.totalorder %s135, %s136
      %p145 = scmp.eq.s32.totalorder %s27, 0
      %p146 = por %p144, %p145
      %p147 = scmp.ne.s32.totalorder %s135, %s136
      %p148 = scmp.eq.s32.totalorder %s28, 7
      %p149 = por %p147, %p148
      %p151 = scmp.ne.s32.totalorder %s136, %s150
      %p152 = scmp.eq.s32.totalorder %s28, 0
      %p153 = por %p151, %p152
      %s155 = sadd.s32 %s154, 1
      %p158 = scmp.eq.s32.totalorder %s22, 7
      %p159 = scmp.ne.s32.totalorder %s154, %s156
      %p160 = scmp.eq.s32.totalorder %s22, 0
      %p161 = por %p159, %p160
      %p162 = scmp.ne.s32.totalorder %s154, %s156
      %p163 = scmp.eq.s32.totalorder %s27, 7
      %p164 = por %p162, %p163
      %p165 = scmp.ne.s32.totalorder %s156, %s157
      %p166 = scmp.eq.s32.totalorder %s27, 0
      %p167 = por %p165, %p166
      %p168 = scmp.ne.s32.totalorder %s156, %s157
      %p169 = scmp.eq.s32.totalorder %s28, 7
      %p170 = por %p168, %p169
      %p172 = scmp.ne.s32.totalorder %s157, %s171
      %p173 = scmp.eq.s32.totalorder %s28, 0
      %p174 = por %p172, %p173
      %s175 = ssub.s32 %s31, %s40
      %p176 = scmp.eq.s32.totalorder %s175, 0
      %s178 = sadd.s32 %s177, 1
      %s179 = scalar_select %p176, %s177, %s178
      %p182 = pneg %p176
      %p183 = scmp.eq.s32.totalorder %s22, 7
      %p184 = por %p182, %p183
      %p185 = scmp.ne.s32.totalorder %s177, %s180
      %p186 = scmp.eq.s32.totalorder %s22, 0
      %p187 = por %p185, %p186
      %p188 = scmp.ne.s32.totalorder %s177, %s180
      %p189 = scmp.eq.s32.totalorder %s27, 7
      %p190 = por %p188, %p189
      %p191 = scmp.ne.s32.totalorder %s180, %s181
      %p192 = scmp.eq.s32.totalorder %s27, 0
      %p193 = por %p191, %p192
      %p194 = scmp.ne.s32.totalorder %s180, %s181
      %p195 = scmp.eq.s32.totalorder %s28, 7
      %p196 = por %p194, %p195
      %p198 = scmp.ne.s32.totalorder %s181, %s197
      %p199 = scmp.eq.s32.totalorder %s28, 0
      %p200 = por %p198, %p199
      %s201 = ssub.s32 %s29, %s48
      %s202 = ssub.s32 %s30, %s44
      %s203 = sor.u32 %s201, %s202
      %p204 = scmp.eq.s32.totalorder %s203, 0
      %s206 = sadd.s32 %s205, 1
      %s207 = scalar_select %p204, %s205, %s206
      %p210 = pneg %p204
      %p211 = scmp.eq.s32.totalorder %s22, 7
      %p212 = por %p210, %p211
      %p213 = scmp.ne.s32.totalorder %s205, %s208
      %p214 = scmp.eq.s32.totalorder %s22, 0
      %p215 = por %p213, %p214
      %p216 = scmp.ne.s32.totalorder %s205, %s208
      %p217 = scmp.eq.s32.totalorder %s27, 7
      %p218 = por %p216, %p217
      %p219 = scmp.ne.s32.totalorder %s208, %s209
      %p220 = scmp.eq.s32.totalorder %s27, 0
      %p221 = por %p219, %p220
      %p222 = scmp.ne.s32.totalorder %s208, %s209
      %p223 = scmp.eq.s32.totalorder %s28, 7
      %p224 = por %p222, %p223
      %p226 = scmp.ne.s32.totalorder %s209, %s225
      %p227 = scmp.eq.s32.totalorder %s28, 0
      %p228 = por %p226, %p227
      %p229 = scmp.le.s32.totalorder 1, %s22
      %p230 = scmp.lt.s32.totalorder %s22, 9
      %p231 = pnand %p229, %p230
      %p232 = pneg %p231
      // Predicated region
      $region9: #{tpu_custom_call.1} parent=5 // pred_check
        _
      $region10: #{tpu_custom_call.1} parent=5 // pred_check_branch
        %234 = sbr.rel (%p231) target = $region12
      $region11: #{tpu_custom_call.1} parent=5 // pred_region
        %s235 = ssub.s32 %s22, 1
        // Predicated region
        $region13: #{tpu_custom_call.1} parent=11 // pred_check
          %p236 = pneg %p146
        $region14: #{tpu_custom_call.1} parent=11 // pred_check_branch
          %238 = sbr.rel (%p236) target = $region16
        $region15: #{tpu_custom_call.1} parent=11 // pred_region
          %s240 = ssub.s32 1024, 1024
          %241 = vsyncadd [#allocation13], %s240
          %s242 = sshll.u32 [#allocation12], 4
          %s243 = int_to_ptr.vmem [resolvable:$true] %s242
          %248 = dma.hbm_to_vmem [thread:$0]  %s3, 1024, %s243, [#allocation13], 64, 64, 4
        $region16: #{tpu_custom_call.1} parent=11 // pred_fallthru
          _
        // Predicated region
        $region17: #{tpu_custom_call.1} parent=11 // pred_check
          %p249 = pneg %p167
        $region18: #{tpu_custom_call.1} parent=11 // pred_check_branch
          %251 = sbr.rel (%p249) target = $region20
        $region19: #{tpu_custom_call.1} parent=11 // pred_region
          _
        $region20: #{tpu_custom_call.1} parent=11 // pred_fallthru
          _
      $region12: #{tpu_custom_call.1} parent=5 // pred_fallthru
        _
      %p252 = scmp.lt.s32.totalorder %s22, 8
      // Predicated region
      $region21: #{tpu_custom_call.1} parent=5 // pred_check
        %p253 = pneg %p252
      $region22: #{tpu_custom_call.1} parent=5 // pred_check_branch
        %255 = sbr.rel (%p253) target = $region24
      $region23: #{tpu_custom_call.1} parent=5 // pred_region
        // Predicated region
        $region25: #{tpu_custom_call.1} parent=23 // pred_check
          %p256 = pneg %p63
        $region26: #{tpu_custom_call.1} parent=23 // pred_check_branch
          %258 = sbr.rel (%p256) target = $region28
        $region27: #{tpu_custom_call.1} parent=23 // pred_region
          %s259 = sand.u32 %s22, 1
          %s260 = scalar_lea.sflag [#allocation7], %s259
          %s261 = sand.u32 %s53, 1
          %s262 = smul.addr %s261, 24
          %s263 = scalar_lea.vmem [#allocation6], %s262
          %s264 = smul.u32 6, %s30
          %s266 = ssub.s32 384, 384
          %267 = vsyncadd %s260, %s266
          %s268 = smul.addr %s29, 12
          %s269 = sadd.s32 %s264, %s268
          %s270 = smul.addr %s269, 64
          %s271 = scalar_lea.hbm %s0, %s270
          %s272 = sshll.u32 %s263, 4
          %s273 = int_to_ptr.vmem [resolvable:$true] %s272
          %278 = dma.hbm_to_vmem [thread:$0]  %s271, 384, %s273, %s260, 64, 64, 4
        $region28: #{tpu_custom_call.1} parent=23 // pred_fallthru
          _
        // Predicated region
        $region29: #{tpu_custom_call.1} parent=23 // pred_check
          %p279 = pneg %p91
        $region30: #{tpu_custom_call.1} parent=23 // pred_check_branch
          %281 = sbr.rel (%p279) target = $region32
        $region31: #{tpu_custom_call.1} parent=23 // pred_region
          %s282 = sand.u32 %s22, 1
          %s283 = scalar_lea.sflag [#allocation10], %s282
          %s284 = sand.u32 %s81, 1
          %s285 = smul.addr %s284, 64
          %s286 = scalar_lea.vmem [#allocation9], %s285
          %s288 = ssub.s32 1024, 1024
          %289 = vsyncadd %s283, %s288
          %s290 = smul.addr %s29, 32
          %s291 = sadd.s32 %s31, %s290
          %s292 = smul.addr %s291, 64
          %s293 = scalar_lea.hbm %s1, %s292
          %s294 = sshll.u32 %s286, 4
          %s295 = int_to_ptr.vmem [resolvable:$true] %s294
          %300 = dma.hbm_to_vmem [thread:$0]  %s293, 1024, %s295, %s283, 128, 64, 4
        $region32: #{tpu_custom_call.1} parent=23 // pred_fallthru
          _
        // Predicated region
        $region33: #{tpu_custom_call.1} parent=23 // pred_check
          %p301 = pneg %p119
        $region34: #{tpu_custom_call.1} parent=23 // pred_check_branch
          %303 = sbr.rel (%p301) target = $region36
        $region35: #{tpu_custom_call.1} parent=23 // pred_region
          %s304 = sand.u32 %s22, 1
          %s305 = scalar_lea.sflag [#allocation10], %s304
          %s306 = sand.u32 %s109, 1
          %s307 = smul.addr %s306, 64
          %s308 = scalar_lea.vmem [#allocation11], %s307
          %s309 = smul.u32 16, %s31
          %s311 = ssub.s32 1024, 1024
          %312 = vsyncadd %s305, %s311
          %s313 = smul.addr %s29, 32
          %s314 = sadd.s32 %s309, %s313
          %s315 = smul.addr %s314, 64
          %s316 = scalar_lea.hbm %s2, %s315
          %s317 = sshll.u32 %s308, 4
          %s318 = int_to_ptr.vmem [resolvable:$true] %s317
          %323 = dma.hbm_to_vmem [thread:$0]  %s316, 1024, %s318, %s305, 64, 64, 4
        $region36: #{tpu_custom_call.1} parent=23 // pred_fallthru
          _
        // Predicated region
        $region37: #{tpu_custom_call.1} parent=23 // pred_check
          %p324 = pneg %p187
        $region38: #{tpu_custom_call.1} parent=23 // pred_check_branch
          %326 = sbr.rel (%p324) target = $region40
        $region39: #{tpu_custom_call.1} parent=23 // pred_region
          %s327 = sand.u32 %s22, 1
          %s328 = scalar_lea.sflag [#allocation7], %s327
          %s329 = sand.u32 %s177, 1
          %s330 = smul.addr %s329, 8
          %s331 = scalar_lea.vmem [#allocation14], %s330
          %s333 = ssub.s32 128, 128
          %334 = vsyncadd %s328, %s333
          %s335 = smul.addr %s31, 128
          %s336 = scalar_lea.hbm %s5, %s335
          %s338 = sshll.u32 %s331, 4
          %s339 = int_to_ptr.vmem [resolvable:$true] %s338
          %341 = dma.hbm_to_vmem [thread:$0]  %s336, 128, %s339, %s328
        $region40: #{tpu_custom_call.1} parent=23 // pred_fallthru
          _
      $region24: #{tpu_custom_call.1} parent=5 // pred_fallthru
        _
      %p342 = scmp.le.s32.totalorder 1, %s22
      %p343 = scmp.lt.s32.totalorder %s22, 9
      %p344 = pnand %p342, %p343
      %p345 = pneg %p344
      // Predicated region
      $region41: #{tpu_custom_call.1} parent=5 // pred_check
        _
      $region42: #{tpu_custom_call.1} parent=5 // pred_check_branch
        %347 = sbr.rel (%p344) target = $region44
      $region43: #{tpu_custom_call.1} parent=5 // pred_region
        %s348 = ssub.s32 %s22, 1
        %s349 = sand.u32 %s27, 1
        %s350 = scalar_lea.sflag [#allocation7], %s349
        %s351 = sand.u32 %s56, 1
        %s352 = smul.addr %s351, 24
        %s353 = scalar_lea.vmem [#allocation6], %s352
        // Predicated region
        $region45: #{tpu_custom_call.1} parent=43 // pred_check
          %p354 = pneg %p69
        $region46: #{tpu_custom_call.1} parent=43 // pred_check_branch
          %356 = sbr.rel (%p354) target = $region48
        $region47: #{tpu_custom_call.1} parent=43 // pred_region
          %357 = dma.done %s350, 384
        $region48: #{tpu_custom_call.1} parent=43 // pred_fallthru
          _
        %s358 = sand.u32 %s27, 1
        %s359 = scalar_lea.sflag [#allocation10], %s358
        %s360 = sand.u32 %s84, 1
        %s361 = smul.addr %s360, 64
        %s362 = scalar_lea.vmem [#allocation9], %s361
        // Predicated region
        $region49: #{tpu_custom_call.1} parent=43 // pred_check
          %p363 = pneg %p97
        $region50: #{tpu_custom_call.1} parent=43 // pred_check_branch
          %365 = sbr.rel (%p363) target = $region52
        $region51: #{tpu_custom_call.1} parent=43 // pred_region
          %366 = dma.done %s359, 1024
        $region52: #{tpu_custom_call.1} parent=43 // pred_fallthru
          _
        %s367 = sand.u32 %s27, 1
        %s368 = scalar_lea.sflag [#allocation10], %s367
        %s369 = sand.u32 %s112, 1
        %s370 = smul.addr %s369, 64
        %s371 = scalar_lea.vmem [#allocation11], %s370
        // Predicated region
        $region53: #{tpu_custom_call.1} parent=43 // pred_check
          %p372 = pneg %p125
        $region54: #{tpu_custom_call.1} parent=43 // pred_check_branch
          %374 = sbr.rel (%p372) target = $region56
        $region55: #{tpu_custom_call.1} parent=43 // pred_region
          %375 = dma.done %s368, 1024
        $region56: #{tpu_custom_call.1} parent=43 // pred_fallthru
          _
        // Predicated region
        $region57: #{tpu_custom_call.1} parent=43 // pred_check
          %p376 = pneg %p146
        $region58: #{tpu_custom_call.1} parent=43 // pred_check_branch
          %378 = sbr.rel (%p376) target = $region60
        $region59: #{tpu_custom_call.1} parent=43 // pred_region
          %379 = dma.done [#allocation13], 1024
        $region60: #{tpu_custom_call.1} parent=43 // pred_fallthru
          _
        %s380 = sand.u32 %s27, 1
        %s381 = scalar_lea.sflag [#allocation7], %s380
        %s382 = sand.u32 %s180, 1
        %s383 = smul.addr %s382, 8
        %s384 = scalar_lea.vmem [#allocation14], %s383
        // Predicated region
        $region61: #{tpu_custom_call.1} parent=43 // pred_check
          %p385 = pneg %p193
        $region62: #{tpu_custom_call.1} parent=43 // pred_check_branch
          %387 = sbr.rel (%p385) target = $region64
        $region63: #{tpu_custom_call.1} parent=43 // pred_region
          %388 = dma.done %s381, 128
        $region64: #{tpu_custom_call.1} parent=43 // pred_fallthru
          _
        %s389 = sand.u32 %s27, 1
        %s390 = scalar_lea.sflag [#allocation7], %s389
        %s391 = sand.u32 %s56, 1
        %s392 = smul.addr %s391, 24
        %s393 = scalar_lea.vmem [#allocation6], %s392
        %p394 = pneg %p69
        %p395 = pneg %p66
        %s396 = sand.u32 %s27, 1
        %s397 = scalar_lea.sflag [#allocation10], %s396
        %s398 = sand.u32 %s84, 1
        %s399 = smul.addr %s398, 64
        %s400 = scalar_lea.vmem [#allocation9], %s399
        %p401 = pneg %p97
        %p402 = pneg %p94
        %s403 = sand.u32 %s27, 1
        %s404 = scalar_lea.sflag [#allocation10], %s403
        %s405 = sand.u32 %s112, 1
        %s406 = smul.addr %s405, 64
        %s407 = scalar_lea.vmem [#allocation11], %s406
        %p408 = pneg %p125
        %p409 = pneg %p122
        %p410 = pneg %p146
        %p411 = pneg %p143
        %p412 = pneg %p167
        %p413 = pneg %p164
        %s414 = sand.u32 %s27, 1
        %s415 = scalar_lea.sflag [#allocation7], %s414
        %s416 = sand.u32 %s180, 1
        %s417 = smul.addr %s416, 8
        %s418 = scalar_lea.vmem [#allocation14], %s417
        %p419 = pneg %p193
        %p420 = pneg %p190
        %p421 = pneg %p221
        %p422 = pneg %p218
        %s423 = sand.u32 %s208, 1
        %s424 = scalar_lea.sflag [#allocation8], %s423
        %s425 = sand.u32 %s208, 1
        %s426 = smul.addr %s425, 48
        %s427 = scalar_lea.vmem [#allocation15], %s426
        %s428 = smul.u32 6, %s33
        %s429 = smul.u32 16, %s34
        %s430 = smul.u32 6, %s33
        %p432 = scmp.eq.s32.totalorder %s34, 0
        // Predicated region
        $region65: #{tpu_custom_call.1} parent=43 // pred_check
          %p433 = pneg %p432
        $region66: #{tpu_custom_call.1} parent=43 // pred_check_branch
          %435 = sbr.rel (%p433) target = $region68
        $region67: #{tpu_custom_call.1} parent=43 // pred_region
          %v436 = vld [vmem:[%s353] sm:$0xf]
          %v437 = vld [vmem:[%s353 + $0x4] sm:$0xf]
          %v438 = vld [vmem:[%s353 + $0x8] sm:$0xf]
          %v439 = vld [vmem:[%s353 + $0xc] sm:$0xf]
          %v440 = vld [vmem:[%s353 + $0x10] sm:$0xf]
          %v441 = vld [vmem:[%s353 + $0x14] sm:$0xf]
          %v442 = vld [vmem:[#allocation12] sm:$0xf]
          %v443 = vld [vmem:[#allocation12 + $0x4] sm:$0xf]
          %v444 = vld [vmem:[#allocation12 + $0x8] sm:$0xf]
          %v445 = vld [vmem:[#allocation12 + $0xc] sm:$0xf]
          %v446 = vld [vmem:[#allocation12 + $0x10] sm:$0xf]
          %v447 = vld [vmem:[#allocation12 + $0x14] sm:$0xf]
          %v448 = vld [vmem:[#allocation12 + $0x18] sm:$0xf]
          %v449 = vld [vmem:[#allocation12 + $0x1c] sm:$0xf]
          %v450 = vld [vmem:[#allocation12 + $0x20] sm:$0xf]
          %v451 = vld [vmem:[#allocation12 + $0x24] sm:$0xf]
          %v452 = vld [vmem:[#allocation12 + $0x28] sm:$0xf]
          %v453 = vld [vmem:[#allocation12 + $0x2c] sm:$0xf]
          %v454 = vld [vmem:[#allocation12 + $0x30] sm:$0xf]
          %v455 = vld [vmem:[#allocation12 + $0x34] sm:$0xf]
          %v456 = vld [vmem:[#allocation12 + $0x38] sm:$0xf]
          %v457 = vld [vmem:[#allocation12 + $0x3c] sm:$0xf]
          %v458 = vld [vmem:[%s4] sm:$0x1]
          %v460 = vlaneseq
          %v461 = vshrl.u32 %v460, 7
          %v462 = vsub.s32 0, %v461
          %v463 = vrot.slane %v458, %v462
          %v471 = vunpack.c.l.b16 %v436
          %v472 = vunpack.c.l.b16 %v437
          %v473 = vunpack.c.l.b16 %v438
          %v474 = vunpack.c.l.b16 %v439
          %v475 = vunpack.c.l.b16 %v440
          %v476 = vunpack.c.l.b16 %v441
          %v477 = vpack.c.b16 %v472, %v471
          %v478 = vpack.c.b16 %v474, %v473
          %v479 = vpack.c.b16 %v476, %v475
          %v499 = vunpack.c.l.b16 %v442
          %v500 = vunpack.c.l.b16 %v443
          %v501 = vunpack.c.l.b16 %v444
          %v502 = vunpack.c.l.b16 %v445
          %v503 = vunpack.c.l.b16 %v446
          %v504 = vunpack.c.l.b16 %v447
          %v505 = vunpack.c.l.b16 %v448
          %v506 = vunpack.c.l.b16 %v449
          %v507 = vunpack.c.l.b16 %v450
          %v508 = vunpack.c.l.b16 %v451
          %v509 = vunpack.c.l.b16 %v452
          %v510 = vunpack.c.l.b16 %v453
          %v511 = vunpack.c.l.b16 %v454
          %v512 = vunpack.c.l.b16 %v455
          %v513 = vunpack.c.l.b16 %v456
          %v514 = vunpack.c.l.b16 %v457
          %v515 = vpack.c.b16 %v500, %v499
          %v516 = vpack.c.b16 %v502, %v501
          %v517 = vpack.c.b16 %v504, %v503
          %v518 = vpack.c.b16 %v506, %v505
          %v519 = vpack.c.b16 %v508, %v507
          %v520 = vpack.c.b16 %v510, %v509
          %v521 = vpack.c.b16 %v512, %v511
          %v522 = vpack.c.b16 %v514, %v513
          %531 = vmatprep.subr.bf16.mxu0 0
          %532 = vmatpush1.bf16.msra.mxu0 %v522
          %533 = vmatprep.subr.bf16.mxu0 0
          %534 = vmatpush1.bf16.msra.mxu0 %v521
          %535 = vmatprep.subr.bf16.mxu0 0
          %536 = vmatpush1.bf16.msra.mxu0 %v520
          %537 = vmatprep.subr.bf16.mxu0 0
          %538 = vmatpush1.bf16.msra.mxu0 %v519
          %539 = vmatprep.subr.bf16.mxu0 0
          %540 = vmatpush1.bf16.msra.mxu0 %v518
          %541 = vmatprep.subr.bf16.mxu0 0
          %542 = vmatpush1.bf16.msra.mxu0 %v517
          %543 = vmatprep.subr.bf16.mxu0 0
          %544 = vmatpush1.bf16.msra.mxu0 %v516
          %545 = vmatprep.subr.bf16.mxu0 0
          %546 = vmatpush1.bf16.msra.mxu0 %v515
          %547 = vmatprep.subr.bf16.mxu0 0
          %548 = vmatpush2.bf16.msra.mxu0 0
          %549 = vmatprep.subr.bf16.mxu0 0
          %550 = vmatpush2.bf16.msra.mxu0 0
          %551 = vmatprep.subr.bf16.mxu0 0
          %552 = vmatpush2.bf16.msra.mxu0 0
          %553 = vmatprep.subr.bf16.mxu0 0
          %554 = vmatpush2.bf16.msra.mxu0 0
          %555 = vmatprep.subr.bf16.mxu0 0
          %556 = vmatpush2.bf16.msra.mxu0 0
          %557 = vmatprep.subr.bf16.mxu0 0
          %558 = vmatpush2.bf16.msra.mxu0 0
          %559 = vmatprep.subr.bf16.mxu0 0
          %560 = vmatpush2.bf16.msra.mxu0 0
          %561 = vmatprep.subr.bf16.mxu0 0
          %562 = vmatpush2.bf16.msra.mxu0 0
          %563 = vmatprep.mubr.bf16.mxu0 0
          %564 = vmatmul.mubr.bf16.gmra.mxu0 %v477
          %v565 = vpop.f32.mrf.mxu0
          %v566 = vadd.f32 %v463, %v565
          %v567 = vpop.f32.mrf.mxu0
          %v568 = vpop.f32.mrf.mxu0
          %v569 = vadd.f32 %v463, %v568
          %v570 = vpop.f32.mrf.mxu0
          %571 = vmatprep.mubr.bf16.mxu0 0
          %572 = vmatmul.mubr.bf16.gmra.mxu0 %v478
          %v573 = vpop.f32.mrf.mxu0
          %v574 = vadd.f32 %v463, %v573
          %v575 = vpop.f32.mrf.mxu0
          %v576 = vpop.f32.mrf.mxu0
          %v577 = vadd.f32 %v463, %v576
          %v578 = vpop.f32.mrf.mxu0
          %579 = vmatprep.mubr.bf16.mxu0 0
          %580 = vmatmul.mubr.bf16.gmra.mxu0 %v479
          %v581 = vpop.f32.mrf.mxu0
          %v582 = vadd.f32 %v463, %v581
          %v583 = vpop.f32.mrf.mxu0
          %v584 = vpop.f32.mrf.mxu0
          %v585 = vadd.f32 %v463, %v584
          %v586 = vpop.f32.mrf.mxu0
          %587 = vdwg.mxu0
          %v588 = vpack.c.bf16 %v569, %v566
          %v589 = vpack.c.bf16 %v577, %v574
          %v590 = vpack.c.bf16 %v585, %v582
          %v594 = vunpack.c.l.b16 %v588
          %v595 = vunpack.c.h.b16 %v588
          %v596 = vunpack.c.l.b16 %v589
          %v597 = vunpack.c.h.b16 %v589
          %v598 = vunpack.c.l.b16 %v590
          %v599 = vunpack.c.h.b16 %v590
          %v600 = vpack.c.b16 %v594, %v594
          %v601 = vpack.c.b16 %v595, %v595
          %v602 = vpack.c.b16 %v596, %v596
          %v603 = vpack.c.b16 %v597, %v597
          %v604 = vpack.c.b16 %v598, %v598
          %v605 = vpack.c.b16 %v599, %v599
          %612 = vst [vmem:[#allocation2] sm:$0xf] %v600
          %613 = vst [vmem:[#allocation2 + $0x4] sm:$0xf] %v601
          %614 = vst [vmem:[#allocation2 + $0x8] sm:$0xf] %v602
          %615 = vst [vmem:[#allocation2 + $0xc] sm:$0xf] %v603
          %616 = vst [vmem:[#allocation2 + $0x10] sm:$0xf] %v604
          %617 = vst [vmem:[#allocation2 + $0x14] sm:$0xf] %v605
          %vm618 = vcmask 7168
          %619 = vst.msk [vmem:[#allocation4] sm:$0xff] %vm618, -inf
          %620 = vst.msk [vmem:[#allocation4 + $0x8] sm:$0xff] %vm618, -inf
          %621 = vst.msk [vmem:[#allocation4 + $0x10] sm:$0xff] %vm618, -inf
          %622 = vst.msk [vmem:[#allocation4 + $0x18] sm:$0xff] %vm618, -inf
          %623 = vst.msk [vmem:[#allocation4 + $0x20] sm:$0xff] %vm618, -inf
          %624 = vst.msk [vmem:[#allocation4 + $0x28] sm:$0xff] %vm618, -inf
          %625 = vst.msk [vmem:[#allocation5] sm:$0xff] %vm618, 0.0
          %626 = vst.msk [vmem:[#allocation5 + $0x8] sm:$0xff] %vm618, 0.0
          %627 = vst.msk [vmem:[#allocation5 + $0x10] sm:$0xff] %vm618, 0.0
          %628 = vst.msk [vmem:[#allocation5 + $0x18] sm:$0xff] %vm618, 0.0
          %629 = vst.msk [vmem:[#allocation5 + $0x20] sm:$0xff] %vm618, 0.0
          %630 = vst.msk [vmem:[#allocation5 + $0x28] sm:$0xff] %vm618, 0.0
          %631 = vst [vmem:[#allocation3] sm:$0xff] 0.0
          %632 = vst [vmem:[#allocation3 + $0x8] sm:$0xff] 0.0
          %633 = vst [vmem:[#allocation3 + $0x10] sm:$0xff] 0.0
          %634 = vst [vmem:[#allocation3 + $0x18] sm:$0xff] 0.0
          %635 = vst [vmem:[#allocation3 + $0x20] sm:$0xff] 0.0
          %636 = vst [vmem:[#allocation3 + $0x28] sm:$0xff] 0.0
        $region68: #{tpu_custom_call.1} parent=43 // pred_fallthru
          _
        %v637 = vld [vmem:[#allocation2] sm:$0xf]
        %v638 = vld [vmem:[#allocation2 + $0x4] sm:$0xf]
        %v639 = vld [vmem:[#allocation2 + $0x8] sm:$0xf]
        %v640 = vld [vmem:[#allocation2 + $0xc] sm:$0xf]
        %v641 = vld [vmem:[#allocation2 + $0x10] sm:$0xf]
        %v642 = vld [vmem:[#allocation2 + $0x14] sm:$0xf]
        %v643 = vld [vmem:[%s362] sm:$0xf]
        %v644 = vld [vmem:[%s362 + $0x4] sm:$0xf]
        %v645 = vld [vmem:[%s362 + $0x8] sm:$0xf]
        %v646 = vld [vmem:[%s362 + $0xc] sm:$0xf]
        %v647 = vld [vmem:[%s362 + $0x10] sm:$0xf]
        %v648 = vld [vmem:[%s362 + $0x14] sm:$0xf]
        %v649 = vld [vmem:[%s362 + $0x18] sm:$0xf]
        %v650 = vld [vmem:[%s362 + $0x1c] sm:$0xf]
        %v651 = vld [vmem:[%s362 + $0x20] sm:$0xf]
        %v652 = vld [vmem:[%s362 + $0x24] sm:$0xf]
        %v653 = vld [vmem:[%s362 + $0x28] sm:$0xf]
        %v654 = vld [vmem:[%s362 + $0x2c] sm:$0xf]
        %v655 = vld [vmem:[%s362 + $0x30] sm:$0xf]
        %v656 = vld [vmem:[%s362 + $0x34] sm:$0xf]
        %v657 = vld [vmem:[%s362 + $0x38] sm:$0xf]
        %v658 = vld [vmem:[%s362 + $0x3c] sm:$0xf]
        %v659 = vld [vmem:[%s384] sm:$0x1]
        %v660 = vlaneseq
        %v661 = vshrl.u32 %v660, 7
        %v662 = vsub.s32 0, %v661
        %v663 = vrot.slane %v659, %v662
        %v670 = vunpack.c.l.b16 %v637
        %v671 = vunpack.c.l.b16 %v638
        %v672 = vunpack.c.l.b16 %v639
        %v673 = vunpack.c.l.b16 %v640
        %v674 = vunpack.c.l.b16 %v641
        %v675 = vunpack.c.l.b16 %v642
        %v676 = vpack.c.b16 %v671, %v670
        %v677 = vpack.c.b16 %v673, %v672
        %v678 = vpack.c.b16 %v675, %v674
        %v698 = vunpack.c.l.b16 %v643
        %v699 = vunpack.c.l.b16 %v644
        %v700 = vunpack.c.l.b16 %v645
        %v701 = vunpack.c.l.b16 %v646
        %v702 = vunpack.c.l.b16 %v647
        %v703 = vunpack.c.l.b16 %v648
        %v704 = vunpack.c.l.b16 %v649
        %v705 = vunpack.c.l.b16 %v650
        %v706 = vunpack.c.l.b16 %v651
        %v707 = vunpack.c.l.b16 %v652
        %v708 = vunpack.c.l.b16 %v653
        %v709 = vunpack.c.l.b16 %v654
        %v710 = vunpack.c.l.b16 %v655
        %v711 = vunpack.c.l.b16 %v656
        %v712 = vunpack.c.l.b16 %v657
        %v713 = vunpack.c.l.b16 %v658
        %v714 = vpack.c.b16 %v699, %v698
        %v715 = vpack.c.b16 %v701, %v700
        %v716 = vpack.c.b16 %v703, %v702
        %v717 = vpack.c.b16 %v705, %v704
        %v718 = vpack.c.b16 %v707, %v706
        %v719 = vpack.c.b16 %v709, %v708
        %v720 = vpack.c.b16 %v711, %v710
        %v721 = vpack.c.b16 %v713, %v712
        %730 = vmatprep.subr.bf16.mxu0 0
        %731 = vmatpush1.bf16.msra.mxu0 %v721
        %732 = vmatprep.subr.bf16.mxu0 0
        %733 = vmatpush1.bf16.msra.mxu0 %v720
        %734 = vmatprep.subr.bf16.mxu0 0
        %735 = vmatpush1.bf16.msra.mxu0 %v719
        %736 = vmatprep.subr.bf16.mxu0 0
        %737 = vmatpush1.bf16.msra.mxu0 %v718
        %738 = vmatprep.subr.bf16.mxu0 0
        %739 = vmatpush1.bf16.msra.mxu0 %v717
        %740 = vmatprep.subr.bf16.mxu0 0
        %741 = vmatpush1.bf16.msra.mxu0 %v716
        %742 = vmatprep.subr.bf16.mxu0 0
        %743 = vmatpush1.bf16.msra.mxu0 %v715
        %744 = vmatprep.subr.bf16.mxu0 0
        %745 = vmatpush1.bf16.msra.mxu0 %v714
        %746 = vmatprep.subr.bf16.mxu0 0
        %747 = vmatpush2.bf16.msra.mxu0 0
        %748 = vmatprep.subr.bf16.mxu0 0
        %749 = vmatpush2.bf16.msra.mxu0 0
        %750 = vmatprep.subr.bf16.mxu0 0
        %751 = vmatpush2.bf16.msra.mxu0 0
        %752 = vmatprep.subr.bf16.mxu0 0
        %753 = vmatpush2.bf16.msra.mxu0 0
        %754 = vmatprep.subr.bf16.mxu0 0
        %755 = vmatpush2.bf16.msra.mxu0 0
        %756 = vmatprep.subr.bf16.mxu0 0
        %757 = vmatpush2.bf16.msra.mxu0 0
        %758 = vmatprep.subr.bf16.mxu0 0
        %759 = vmatpush2.bf16.msra.mxu0 0
        %760 = vmatprep.subr.bf16.mxu0 0
        %761 = vmatpush2.bf16.msra.mxu0 0
        %762 = vmatprep.mubr.bf16.mxu0 0
        %763 = vmatmul.mubr.bf16.gmra.mxu0 %v676
        %v764 = vpop.f32.mrf.mxu0
        %v765 = vadd.f32 %v663, %v764
        %v766 = vpop.f32.mrf.mxu0
        %v767 = vpop.f32.mrf.mxu0
        %v768 = vadd.f32 %v663, %v767
        %v769 = vpop.f32.mrf.mxu0
        %770 = vmatprep.mubr.bf16.mxu0 0
        %771 = vmatmul.mubr.bf16.gmra.mxu0 %v677
        %v772 = vpop.f32.mrf.mxu0
        %v773 = vadd.f32 %v663, %v772
        %v774 = vpop.f32.mrf.mxu0
        %v775 = vpop.f32.mrf.mxu0
        %v776 = vadd.f32 %v663, %v775
        %v777 = vpop.f32.mrf.mxu0
        %778 = vmatprep.mubr.bf16.mxu0 0
        %779 = vmatmul.mubr.bf16.gmra.mxu0 %v678
        %v780 = vpop.f32.mrf.mxu0
        %v781 = vadd.f32 %v663, %v780
        %v782 = vpop.f32.mrf.mxu0
        %v783 = vpop.f32.mrf.mxu0
        %v784 = vadd.f32 %v663, %v783
        %v785 = vpop.f32.mrf.mxu0
        %786 = vdwg.mxu0
        %v787 = vld [vmem:[#allocation4] sm:$0xff]
        %v788 = vld [vmem:[#allocation4 + $0x8] sm:$0xff]
        %v789 = vld [vmem:[#allocation4 + $0x10] sm:$0xff]
        %v790 = vld [vmem:[#allocation4 + $0x18] sm:$0xff]
        %v791 = vld [vmem:[#allocation4 + $0x20] sm:$0xff]
        %v792 = vld [vmem:[#allocation4 + $0x28] sm:$0xff]
        %793 = vmax.xlane.f32.xlu0 %v765
        %v794 = vpop.xlane.xlu0 %793
        %795 = vmax.xlane.f32.xlu0 %v768
        %v796 = vpop.xlane.xlu0 %795
        %797 = vmax.xlane.f32.xlu0 %v773
        %v798 = vpop.xlane.xlu0 %797
        %799 = vmax.xlane.f32.xlu0 %v776
        %v800 = vpop.xlane.xlu0 %799
        %801 = vmax.xlane.f32.xlu0 %v781
        %v802 = vpop.xlane.xlu0 %801
        %803 = vmax.xlane.f32.xlu0 %v784
        %v804 = vpop.xlane.xlu0 %803
        %v805 = vmax.f32 %v787, %v794
        %v806 = vmax.f32 %v788, %v796
        %v807 = vmax.f32 %v789, %v798
        %v808 = vmax.f32 %v790, %v800
        %v809 = vmax.f32 %v791, %v802
        %v810 = vmax.f32 %v792, %v804
        %v811 = vsub.f32 %v787, %v805
        %v812 = vsub.f32 %v788, %v806
        %v813 = vsub.f32 %v789, %v807
        %v814 = vsub.f32 %v790, %v808
        %v815 = vsub.f32 %v791, %v809
        %v816 = vsub.f32 %v792, %v810
        %v817 = vmul.f32 %v811, 1.442695
        %v818 = vpow.pop %v817
        %v819 = vmul.f32 %v812, 1.442695
        %v820 = vpow.pop %v819
        %v821 = vmul.f32 %v813, 1.442695
        %v822 = vpow.pop %v821
        %v823 = vmul.f32 %v814, 1.442695
        %v824 = vpow.pop %v823
        %v825 = vmul.f32 %v815, 1.442695
        %v826 = vpow.pop %v825
        %v827 = vmul.f32 %v816, 1.442695
        %v828 = vpow.pop %v827
        %830 = vset.pattern.permute.xlu0 0
        %831 = vperm.xlu0 %830, %v805
        %v832 = vpop.permute.xlu0 %831
        %835 = vset.pattern.permute.xlu0 0
        %836 = vperm.xlu0 %835, %v806
        %v837 = vpop.permute.xlu0 %836
        %840 = vset.pattern.permute.xlu0 0
        %841 = vperm.xlu0 %840, %v807
        %v842 = vpop.permute.xlu0 %841
        %845 = vset.pattern.permute.xlu0 0
        %846 = vperm.xlu0 %845, %v808
        %v847 = vpop.permute.xlu0 %846
        %850 = vset.pattern.permute.xlu0 0
        %851 = vperm.xlu0 %850, %v809
        %v852 = vpop.permute.xlu0 %851
        %855 = vset.pattern.permute.xlu0 0
        %856 = vperm.xlu0 %855, %v810
        %v857 = vpop.permute.xlu0 %856
        %v859 = vsub.f32 %v765, %v832
        %v860 = vsub.f32 %v768, %v837
        %v861 = vsub.f32 %v773, %v842
        %v862 = vsub.f32 %v776, %v847
        %v863 = vsub.f32 %v781, %v852
        %v864 = vsub.f32 %v784, %v857
        %v865 = vpack.c.bf16 %v860, %v859
        %v866 = vpack.c.bf16 %v862, %v861
        %v867 = vpack.c.bf16 %v864, %v863
        %v869 = vmul.bf16 %v865, 1069105081
        %v870 = vpow.bf16.pop %v869
        %v872 = vmul.bf16 %v866, 1069105081
        %v873 = vpow.bf16.pop %v872
        %v875 = vmul.bf16 %v867, 1069105081
        %v876 = vpow.bf16.pop %v875
        %v877 = vunpack.c.l.bf16 %v870
        %v878 = vunpack.c.h.bf16 %v870
        %v879 = vunpack.c.l.bf16 %v873
        %v880 = vunpack.c.h.bf16 %v873
        %v881 = vunpack.c.l.bf16 %v876
        %v882 = vunpack.c.h.bf16 %v876
        %883 = vadd.xlane.f32.xlu0 %v877
        %v884 = vpop.xlane.xlu0 %883
        %885 = vadd.xlane.f32.xlu0 %v878
        %v886 = vpop.xlane.xlu0 %885
        %887 = vadd.xlane.f32.xlu0 %v879
        %v888 = vpop.xlane.xlu0 %887
        %889 = vadd.xlane.f32.xlu0 %v880
        %v890 = vpop.xlane.xlu0 %889
        %891 = vadd.xlane.f32.xlu0 %v881
        %v892 = vpop.xlane.xlu0 %891
        %893 = vadd.xlane.f32.xlu0 %v882
        %v894 = vpop.xlane.xlu0 %893
        %v895 = vld [vmem:[%s371] sm:$0xf]
        %v896 = vld [vmem:[%s371 + $0x4] sm:$0xf]
        %v897 = vld [vmem:[%s371 + $0x8] sm:$0xf]
        %v898 = vld [vmem:[%s371 + $0xc] sm:$0xf]
        %v899 = vld [vmem:[%s371 + $0x10] sm:$0xf]
        %v900 = vld [vmem:[%s371 + $0x14] sm:$0xf]
        %v901 = vld [vmem:[%s371 + $0x18] sm:$0xf]
        %v902 = vld [vmem:[%s371 + $0x1c] sm:$0xf]
        %v903 = vld [vmem:[%s371 + $0x20] sm:$0xf]
        %v904 = vld [vmem:[%s371 + $0x24] sm:$0xf]
        %v905 = vld [vmem:[%s371 + $0x28] sm:$0xf]
        %v906 = vld [vmem:[%s371 + $0x2c] sm:$0xf]
        %v907 = vld [vmem:[%s371 + $0x30] sm:$0xf]
        %v908 = vld [vmem:[%s371 + $0x34] sm:$0xf]
        %v909 = vld [vmem:[%s371 + $0x38] sm:$0xf]
        %v910 = vld [vmem:[%s371 + $0x3c] sm:$0xf]
        %v927 = vunpack.c.l.b16 %v895
        %v928 = vunpack.c.l.b16 %v896
        %v929 = vunpack.c.l.b16 %v897
        %v930 = vunpack.c.l.b16 %v898
        %v931 = vunpack.c.l.b16 %v899
        %v932 = vunpack.c.l.b16 %v900
        %v933 = vunpack.c.l.b16 %v901
        %v934 = vunpack.c.l.b16 %v902
        %v935 = vunpack.c.l.b16 %v903
        %v936 = vunpack.c.l.b16 %v904
        %v937 = vunpack.c.l.b16 %v905
        %v938 = vunpack.c.l.b16 %v906
        %v939 = vunpack.c.l.b16 %v907
        %v940 = vunpack.c.l.b16 %v908
        %v941 = vunpack.c.l.b16 %v909
        %v942 = vunpack.c.l.b16 %v910
        %v943 = vpack.c.b16 %v928, %v927
        %v944 = vpack.c.b16 %v930, %v929
        %v945 = vpack.c.b16 %v932, %v931
        %v946 = vpack.c.b16 %v934, %v933
        %v947 = vpack.c.b16 %v936, %v935
        %v948 = vpack.c.b16 %v938, %v937
        %v949 = vpack.c.b16 %v940, %v939
        %v950 = vpack.c.b16 %v942, %v941
        %959 = vmatprep.subr.bf16.mxu0 0
        %960 = vmatpush1.bf16.msra.mxu0 %v950
        %961 = vmatprep.subr.bf16.mxu0 0
        %962 = vmatpush1.bf16.msra.mxu0 %v949
        %963 = vmatprep.subr.bf16.mxu0 0
        %964 = vmatpush1.bf16.msra.mxu0 %v948
        %965 = vmatprep.subr.bf16.mxu0 0
        %966 = vmatpush1.bf16.msra.mxu0 %v947
        %967 = vmatprep.subr.bf16.mxu0 0
        %968 = vmatpush1.bf16.msra.mxu0 %v946
        %969 = vmatprep.subr.bf16.mxu0 0
        %970 = vmatpush1.bf16.msra.mxu0 %v945
        %971 = vmatprep.subr.bf16.mxu0 0
        %972 = vmatpush1.bf16.msra.mxu0 %v944
        %973 = vmatprep.subr.bf16.mxu0 0
        %974 = vmatpush1.bf16.msra.mxu0 %v943
        %975 = vmatprep.subr.bf16.mxu0 0
        %976 = vmatpush2.bf16.msra.mxu0 0
        %977 = vmatprep.subr.bf16.mxu0 0
        %978 = vmatpush2.bf16.msra.mxu0 0
        %979 = vmatprep.subr.bf16.mxu0 0
        %980 = vmatpush2.bf16.msra.mxu0 0
        %981 = vmatprep.subr.bf16.mxu0 0
        %982 = vmatpush2.bf16.msra.mxu0 0
        %983 = vmatprep.subr.bf16.mxu0 0
        %984 = vmatpush2.bf16.msra.mxu0 0
        %985 = vmatprep.subr.bf16.mxu0 0
        %986 = vmatpush2.bf16.msra.mxu0 0
        %987 = vmatprep.subr.bf16.mxu0 0
        %988 = vmatpush2.bf16.msra.mxu0 0
        %989 = vmatprep.subr.bf16.mxu0 0
        %990 = vmatpush2.bf16.msra.mxu0 0
        %991 = vmatprep.mubr.bf16.mxu0 0
        %992 = vmatmul.mubr.bf16.gmra.mxu0 %v870
        %v993 = vpop.f32.mrf.mxu0
        %v994 = vadd.f32 0.0, %v993
        %v995 = vpop.f32.mrf.mxu0
        %v996 = vpop.f32.mrf.mxu0
        %v997 = vadd.f32 0.0, %v996
        %v998 = vpop.f32.mrf.mxu0
        %999 = vmatprep.mubr.bf16.mxu0 0
        %1000 = vmatmul.mubr.bf16.gmra.mxu0 %v873
        %v1001 = vpop.f32.mrf.mxu0
        %v1002 = vadd.f32 0.0, %v1001
        %v1003 = vpop.f32.mrf.mxu0
        %v1004 = vpop.f32.mrf.mxu0
        %v1005 = vadd.f32 0.0, %v1004
        %v1006 = vpop.f32.mrf.mxu0
        %1007 = vmatprep.mubr.bf16.mxu0 0
        %1008 = vmatmul.mubr.bf16.gmra.mxu0 %v876
        %v1009 = vpop.f32.mrf.mxu0
        %v1010 = vadd.f32 0.0, %v1009
        %v1011 = vpop.f32.mrf.mxu0
        %v1012 = vpop.f32.mrf.mxu0
        %v1013 = vadd.f32 0.0, %v1012
        %v1014 = vpop.f32.mrf.mxu0
        %1015 = vdwg.mxu0
        %v1016 = vld [vmem:[#allocation5] sm:$0xff]
        %v1017 = vld [vmem:[#allocation5 + $0x8] sm:$0xff]
        %v1018 = vld [vmem:[#allocation5 + $0x10] sm:$0xff]
        %v1019 = vld [vmem:[#allocation5 + $0x18] sm:$0xff]
        %v1020 = vld [vmem:[#allocation5 + $0x20] sm:$0xff]
        %v1021 = vld [vmem:[#allocation5 + $0x28] sm:$0xff]
        %v1022 = vmul.f32 %v818, %v1016
        %v1023 = vmul.f32 %v820, %v1017
        %v1024 = vmul.f32 %v822, %v1018
        %v1025 = vmul.f32 %v824, %v1019
        %v1026 = vmul.f32 %v826, %v1020
        %v1027 = vmul.f32 %v828, %v1021
        %v1028 = vadd.f32 %v1022, %v884
        %v1029 = vadd.f32 %v1023, %v886
        %v1030 = vadd.f32 %v1024, %v888
        %v1031 = vadd.f32 %v1025, %v890
        %v1032 = vadd.f32 %v1026, %v892
        %v1033 = vadd.f32 %v1027, %v894
        %vm1034 = vcmask 7168
        %1035 = vst.msk [vmem:[#allocation5] sm:$0xff] %vm1034, %v1028
        %1036 = vst.msk [vmem:[#allocation5 + $0x8] sm:$0xff] %vm1034, %v1029
        %1037 = vst.msk [vmem:[#allocation5 + $0x10] sm:$0xff] %vm1034, %v1030
        %1038 = vst.msk [vmem:[#allocation5 + $0x18] sm:$0xff] %vm1034, %v1031
        %1039 = vst.msk [vmem:[#allocation5 + $0x20] sm:$0xff] %vm1034, %v1032
        %1040 = vst.msk [vmem:[#allocation5 + $0x28] sm:$0xff] %vm1034, %v1033
        %v1041 = vld [vmem:[#allocation3] sm:$0xff]
        %v1042 = vld [vmem:[#allocation3 + $0x8] sm:$0xff]
        %v1043 = vld [vmem:[#allocation3 + $0x10] sm:$0xff]
        %v1044 = vld [vmem:[#allocation3 + $0x18] sm:$0xff]
        %v1045 = vld [vmem:[#allocation3 + $0x20] sm:$0xff]
        %v1046 = vld [vmem:[#allocation3 + $0x28] sm:$0xff]
        %1048 = vset.pattern.permute.xlu0 0
        %1049 = vperm.xlu0 %1048, %v818
        %v1050 = vpop.permute.xlu0 %1049
        %1053 = vset.pattern.permute.xlu0 0
        %1054 = vperm.xlu0 %1053, %v820
        %v1055 = vpop.permute.xlu0 %1054
        %1058 = vset.pattern.permute.xlu0 0
        %1059 = vperm.xlu0 %1058, %v822
        %v1060 = vpop.permute.xlu0 %1059
        %1063 = vset.pattern.permute.xlu0 0
        %1064 = vperm.xlu0 %1063, %v824
        %v1065 = vpop.permute.xlu0 %1064
        %1068 = vset.pattern.permute.xlu0 0
        %1069 = vperm.xlu0 %1068, %v826
        %v1070 = vpop.permute.xlu0 %1069
        %1073 = vset.pattern.permute.xlu0 0
        %1074 = vperm.xlu0 %1073, %v828
        %v1075 = vpop.permute.xlu0 %1074
        %v1077 = vmul.f32 %v1050, %v1041
        %v1078 = vmul.f32 %v1055, %v1042
        %v1079 = vmul.f32 %v1060, %v1043
        %v1080 = vmul.f32 %v1065, %v1044
        %v1081 = vmul.f32 %v1070, %v1045
        %v1082 = vmul.f32 %v1075, %v1046
        %v1083 = vadd.f32 %v1077, %v994
        %v1084 = vadd.f32 %v1078, %v997
        %v1085 = vadd.f32 %v1079, %v1002
        %v1086 = vadd.f32 %v1080, %v1005
        %v1087 = vadd.f32 %v1081, %v1010
        %v1088 = vadd.f32 %v1082, %v1013
        %1089 = vst [vmem:[#allocation3] sm:$0xff] %v1083
        %1090 = vst [vmem:[#allocation3 + $0x8] sm:$0xff] %v1084
        %1091 = vst [vmem:[#allocation3 + $0x10] sm:$0xff] %v1085
        %1092 = vst [vmem:[#allocation3 + $0x18] sm:$0xff] %v1086
        %1093 = vst [vmem:[#allocation3 + $0x20] sm:$0xff] %v1087
        %1094 = vst [vmem:[#allocation3 + $0x28] sm:$0xff] %v1088
        %1095 = vst.msk [vmem:[#allocation4] sm:$0xff] %vm1034, %v805
        %1096 = vst.msk [vmem:[#allocation4 + $0x8] sm:$0xff] %vm1034, %v806
        %1097 = vst.msk [vmem:[#allocation4 + $0x10] sm:$0xff] %vm1034, %v807
        %1098 = vst.msk [vmem:[#allocation4 + $0x18] sm:$0xff] %vm1034, %v808
        %1099 = vst.msk [vmem:[#allocation4 + $0x20] sm:$0xff] %vm1034, %v809
        %1100 = vst.msk [vmem:[#allocation4 + $0x28] sm:$0xff] %vm1034, %v810
        %p1101 = scmp.eq.s32.totalorder %s34, 1
        // Predicated region
        $region69: #{tpu_custom_call.1} parent=43 // pred_check
          %p1102 = pneg %p1101
        $region70: #{tpu_custom_call.1} parent=43 // pred_check_branch
          %1104 = sbr.rel (%p1102) target = $region72
        $region71: #{tpu_custom_call.1} parent=43 // pred_region
          %v1105 = vld [vmem:[#allocation5] sm:$0xff]
          %v1106 = vld [vmem:[#allocation5 + $0x8] sm:$0xff]
          %v1107 = vld [vmem:[#allocation5 + $0x10] sm:$0xff]
          %v1108 = vld [vmem:[#allocation5 + $0x18] sm:$0xff]
          %v1109 = vld [vmem:[#allocation5 + $0x20] sm:$0xff]
          %v1110 = vld [vmem:[#allocation5 + $0x28] sm:$0xff]
          %v1111 = vrcp.pop %v1105
          %v1112 = vrcp.pop %v1106
          %v1113 = vrcp.pop %v1107
          %v1114 = vrcp.pop %v1108
          %v1115 = vrcp.pop %v1109
          %v1116 = vrcp.pop %v1110
          %v1117 = vld [vmem:[#allocation3] sm:$0xff]
          %v1118 = vld [vmem:[#allocation3 + $0x8] sm:$0xff]
          %v1119 = vld [vmem:[#allocation3 + $0x10] sm:$0xff]
          %v1120 = vld [vmem:[#allocation3 + $0x18] sm:$0xff]
          %v1121 = vld [vmem:[#allocation3 + $0x20] sm:$0xff]
          %v1122 = vld [vmem:[#allocation3 + $0x28] sm:$0xff]
          %1124 = vset.pattern.permute.xlu0 0
          %1125 = vperm.xlu0 %1124, %v1111
          %v1126 = vpop.permute.xlu0 %1125
          %1129 = vset.pattern.permute.xlu0 0
          %1130 = vperm.xlu0 %1129, %v1112
          %v1131 = vpop.permute.xlu0 %1130
          %1134 = vset.pattern.permute.xlu0 0
          %1135 = vperm.xlu0 %1134, %v1113
          %v1136 = vpop.permute.xlu0 %1135
          %1139 = vset.pattern.permute.xlu0 0
          %1140 = vperm.xlu0 %1139, %v1114
          %v1141 = vpop.permute.xlu0 %1140
          %1144 = vset.pattern.permute.xlu0 0
          %1145 = vperm.xlu0 %1144, %v1115
          %v1146 = vpop.permute.xlu0 %1145
          %1149 = vset.pattern.permute.xlu0 0
          %1150 = vperm.xlu0 %1149, %v1116
          %v1151 = vpop.permute.xlu0 %1150
          %v1153 = vmul.f32 %v1117, %v1126
          %v1154 = vmul.f32 %v1118, %v1131
          %v1155 = vmul.f32 %v1119, %v1136
          %v1156 = vmul.f32 %v1120, %v1141
          %v1157 = vmul.f32 %v1121, %v1146
          %v1158 = vmul.f32 %v1122, %v1151
          %1159 = vst [vmem:[%s427] sm:$0xff] %v1153
          %1160 = vst [vmem:[%s427 + $0x8] sm:$0xff] %v1154
          %1161 = vst [vmem:[%s427 + $0x10] sm:$0xff] %v1155
          %1162 = vst [vmem:[%s427 + $0x18] sm:$0xff] %v1156
          %1163 = vst [vmem:[%s427 + $0x20] sm:$0xff] %v1157
          %1164 = vst [vmem:[%s427 + $0x28] sm:$0xff] %v1158
        $region72: #{tpu_custom_call.1} parent=43 // pred_fallthru
          _
        %s1165 = sand.u32 %s208, 1
        %s1166 = scalar_lea.sflag [#allocation8], %s1165
        %s1167 = sand.u32 %s208, 1
        %s1168 = smul.addr %s1167, 48
        %s1169 = scalar_lea.vmem [#allocation15], %s1168
        // Predicated region
        $region73: #{tpu_custom_call.1} parent=43 // pred_check
          %p1170 = pneg %p218
        $region74: #{tpu_custom_call.1} parent=43 // pred_check_branch
          %1172 = sbr.rel (%p1170) target = $region76
        $region75: #{tpu_custom_call.1} parent=43 // pred_region
          %s1173 = smul.u32 6, %s33
          %s1175 = ssub.s32 768, 768
          %1176 = vsyncadd %s1166, %s1175
          %s1177 = smul.addr %s32, 12
          %s1178 = sadd.s32 %s1173, %s1177
          %s1179 = smul.addr %s1178, 128
          %s1180 = scalar_lea.hbm %s6, %s1179
          %s1181 = sshll.u32 %s1169, 4
          %s1182 = int_to_ptr.vmem [resolvable:$true] %s1181
          %1187 = dma.vmem_to_hbm [thread:$0]  %s1182, 768, %s1180, %s1166, 128, 128, 8
        $region76: #{tpu_custom_call.1} parent=43 // pred_fallthru
          _
      $region44: #{tpu_custom_call.1} parent=5 // pred_fallthru
        _
      %p1188 = scmp.le.s32.totalorder 2, %s22
      // Predicated region
      $region77: #{tpu_custom_call.1} parent=5 // pred_check
        %p1189 = pneg %p1188
      $region78: #{tpu_custom_call.1} parent=5 // pred_check_branch
        %1191 = sbr.rel (%p1189) target = $region80
      $region79: #{tpu_custom_call.1} parent=5 // pred_region
        %s1192 = ssub.s32 %s22, 2
        // Predicated region
        $region81: #{tpu_custom_call.1} parent=79 // pred_check
          %p1193 = pneg %p224
        $region82: #{tpu_custom_call.1} parent=79 // pred_check_branch
          %1195 = sbr.rel (%p1193) target = $region84
        $region83: #{tpu_custom_call.1} parent=79 // pred_region
          %s1196 = sand.u32 %s209, 1
          %s1197 = scalar_lea.sflag [#allocation8], %s1196
          %s1198 = sand.u32 %s209, 1
          %s1199 = smul.addr %s1198, 48
          %s1200 = scalar_lea.vmem [#allocation15], %s1199
          %1201 = dma.done %s1197, 768
        $region84: #{tpu_custom_call.1} parent=79 // pred_fallthru
          _
      $region80: #{tpu_custom_call.1} parent=5 // pred_fallthru
        _
    $region6: #{tpu_custom_call.1} parent=1 // loop_footer
      %s26 = sadd.s32 1, %s22
    $region7: #{tpu_custom_call.1} parent=1 // loop_footer_branch
      %21 = sbr.rel target = $region3
    $region8: #{tpu_custom_call.1} parent=1 // loop_exit
      _
    %1202 = vsyncpa [#allocation7], 1
    %s1203 = scalar_lea.sflag [#allocation7], 1
    %1204 = vsyncpa %s1203, 1
    %1205 = vsyncpa [#allocation10], 1
    %s1206 = scalar_lea.sflag [#allocation10], 1
    %1207 = vsyncpa %s1206, 1
    %1208 = vsyncpa [#allocation13], 1
    %1209 = vsyncpa [#allocation8], 1
    %s1210 = scalar_lea.sflag [#allocation8], 1
    %1211 = vsyncpa %s1210, 1

</llo_original>
